<compile_context>
chip_gen: v5e
topology: v5e:2x2
jax: 0.10.0
libtpu: 0.0.40
codegen_flags: <defaults>
</compile_context>

<pallas_src>
import math

import jax
import jax.numpy as jnp
from jax.experimental import pallas as pl
from jax.experimental.pallas import tpu as pltpu


def _attention_kernel(x_ref, mask_ref, q_ref, cste_ref, wt_ref, bias_ref,
                      pred_ref, attn_ref):
    # x_ref:    (TB, L, D)  batch block, f32
    # mask_ref: (TB, L)     int32, 1 == padded position
    # q_ref:    (1, D)      attention query vector (row layout)
    # cste_ref: (1,)        scalar offset, SMEM
    # wt_ref:   (D, O_pad)  classifier weight (transposed, lane-padded)
    # bias_ref: (1, O_pad)  classifier bias (lane-padded)
    # pred_ref: (TB, O_pad) output logits block
    # attn_ref: (TB, L)     attention weights block (lane-dense)
    x = x_ref[...]                                      # (TB, L, D)
    q = q_ref[...]                                      # (1, D)
    cste = cste_ref[0]                                  # scalar (SMEM)

    D = x.shape[-1]
    scale = 1.0 / math.sqrt(D)

    # scores[b, l] = (cste + <x[b, l, :], q>) / sqrt(D)   -> (TB, L), L on lanes
    scores = jnp.sum(x * q[None, :, :], axis=-1)         # (TB, L)
    scores = (scores + cste) * scale

    # mask padded positions with -inf (NaN for fully-masked rows, as in PyTorch)
    scores = jnp.where(mask_ref[...] > 0, -jnp.inf, scores)

    # softmax over the sequence axis == last (lane) axis: full-width reductions
    m = jnp.max(scores, axis=-1, keepdims=True)          # (TB, 1)
    e = jnp.exp(scores - m)                              # (TB, L)
    denom = jnp.sum(e, axis=-1, keepdims=True)           # (TB, 1)
    attn = e * pl.reciprocal(denom, approx=True)         # (TB, L), EUP reciprocal
    attn_ref[...] = attn

    # weighted sum over the sequence: z[b, d] = sum_l attn[b, l] * x[b, l, d]
    z = jnp.sum(attn[:, :, None] * x, axis=1)            # (TB, D)

    # batched classifier: one (TB, D) @ (D, O_pad) MXU matmul per grid step
    pred_ref[...] = (
        jnp.dot(z, wt_ref[...], preferred_element_type=jnp.float32)
        + bias_ref[...]
    )


def _pick_block_b(L, D, o_pad, budget_bytes=6 << 20):
    """Largest multiple-of-8 batch tile whose double-buffered f32 working set
    (x + mask in, pred + attn out) stays under `budget_bytes` (safe on the v5e
    16 MiB scoped-VMEM default and on v7x's 64 MiB physical VMEM)."""
    per_row = 4 * (L * D + L + o_pad + L)
    tb = (budget_bytes // (2 * per_row)) // 8 * 8
    return int(max(8, min(4096, tb)))


def attention_model_q2_forward(x, mask_pad, params, *, block_b=None):
    """x: (L, B, D) float32, mask_pad: (L, B) bool. Returns (pred, attn) in the
    PyTorch layout: pred (1, B, out_dim), attn (L, B, 1)."""
    L, B, D = x.shape
    out_dim = params["W"].shape[0]
    o_pad = max(128, ((out_dim + 127) // 128) * 128)     # lane-pad classifier N

    # ---- glue: batch-major, lane-dense layouts ----
    x_k = jnp.transpose(x, (1, 0, 2)).astype(jnp.float32)             # (B, L, D)
    mask_k = jnp.transpose(mask_pad, (1, 0)).astype(jnp.int32)        # (B, L)

    if block_b is None:
        block_b = _pick_block_b(L, D, o_pad)
    block_b = max(8, (block_b // 8) * 8)

    if B <= block_b:
        tb, b_pad = B, B                                  # single grid step
    else:
        tb = block_b
        b_pad = pl.cdiv(B, tb) * tb
    if b_pad != B:
        # padded rows: x = 0, mask = 0 (valid) so the math stays finite; sliced off.
        x_k = jnp.pad(x_k, ((0, b_pad - B), (0, 0), (0, 0)))
        mask_k = jnp.pad(mask_k, ((0, b_pad - B), (0, 0)))

    q_row = params["q"].reshape(1, D).astype(jnp.float32)             # (1, D)
    cste = params["cste"].reshape(1).astype(jnp.float32)              # (1,) -> SMEM
    wt = jnp.pad(params["W"].T.astype(jnp.float32),
                 ((0, 0), (0, o_pad - out_dim)))                      # (D, O_pad)
    bias = jnp.pad(params["b"].reshape(1, out_dim).astype(jnp.float32),
                   ((0, 0), (0, o_pad - out_dim)))                    # (1, O_pad)

    pred_k, attn_k = pl.pallas_call(
        _attention_kernel,
        grid=(b_pad // tb,),
        in_specs=[
            pl.BlockSpec((tb, L, D), lambda b: (b, 0, 0)),            # x block
            pl.BlockSpec((tb, L), lambda b: (b, 0)),                  # mask block
            pl.BlockSpec((1, D), lambda b: (0, 0)),                   # q
            pl.BlockSpec(memory_space=pltpu.MemorySpace.SMEM),        # cste scalar
            pl.BlockSpec((D, o_pad), lambda b: (0, 0)),               # W^T (padded)
            pl.BlockSpec((1, o_pad), lambda b: (0, 0)),               # bias (padded)
        ],
        out_specs=[
            pl.BlockSpec((tb, o_pad), lambda b: (b, 0)),              # pred block
            pl.BlockSpec((tb, L), lambda b: (b, 0)),                  # attn block
        ],
        out_shape=(
            jax.ShapeDtypeStruct((b_pad, o_pad), jnp.float32),
            jax.ShapeDtypeStruct((b_pad, L), jnp.float32),
        ),
        compiler_params=pltpu.CompilerParams(
            dimension_semantics=("parallel",)),
    )(x_k, mask_k, q_row, cste, wt, bias)

    # ---- glue: back to PyTorch conventions ----
    pred = pred_k[:B, :out_dim][None, :, :]                # (1, B, out_dim)
    attn = jnp.transpose(attn_k[:B], (1, 0))[:, :, None]   # (L, B, 1)
    return pred, attn


def reference_forward(x, mask_pad, params):
    """Pure-JAX reference matching the PyTorch module semantics."""
    D = x.shape[-1]
    attn = x @ params["q"]                                        # (L, B, 1)
    attn = (params["cste"] + attn) / jnp.sqrt(jnp.float32(D))
    attn = jnp.where(mask_pad[:, :, None], -jnp.inf, attn)
    attn = jax.nn.softmax(attn, axis=0)                           # (L, B, 1)
    z = jnp.einsum("lb,lbd->bd", attn[..., 0], x)[None, ...]      # (1, B, D)
    pred = z @ params["W"].T + params["b"]                        # (1, B, out)
    return pred, attn


if __name__ == "__main__":
    L, B, D, OUT = 8, 16, 32, 16   # seq, batch, input_dim, out_dim

    key = jax.random.PRNGKey(0)
    kx, kq, kc, kw, kb = jax.random.split(key, 5)

    x = jax.random.normal(kx, (L, B, D), dtype=jnp.float32)
    mask_pad = jnp.zeros((L, B), dtype=bool)
    mask_pad = mask_pad.at[6:, 1].set(True)   # pad tail of batch element 1
    mask_pad = mask_pad.at[4:, 5].set(True)   # pad tail of batch element 5

    params = {
        "q": jax.random.normal(kq, (D, 1), dtype=jnp.float32),
        "cste": jax.random.normal(kc, (1,), dtype=jnp.float32),
        "W": jax.random.normal(kw, (OUT, D), dtype=jnp.float32) * 0.1,
        "b": jax.random.normal(kb, (OUT,), dtype=jnp.float32) * 0.1,
    }

    pred_ref, attn_ref = reference_forward(x, mask_pad, params)

    # Run both the default single-block path and a forced multi-step grid
    # (block_b=8 -> grid=(2,)) to exercise batch-blocking + padding logic.
    for blk in (None, 8):
        pred, attn = attention_model_q2_forward(x, mask_pad, params, block_b=blk)
        pred = jax.block_until_ready(pred)
        attn = jax.block_until_ready(attn)

        assert pred.shape == (1, B, OUT), pred.shape
        assert attn.shape == (L, B, 1), attn.shape
        # approx (EUP) reciprocal in the softmax denominator -> slightly looser tol
        assert jnp.allclose(pred, pred_ref, rtol=2e-3, atol=2e-3)
        assert jnp.allclose(attn, attn_ref, rtol=2e-3, atol=2e-3)

    print("KERNEL_OK")
</pallas_src>

<mosaic_0001>
module attributes {stable_mosaic.version = 11 : i64} {
  func.func @_attention_kernel(%arg0: i32, %arg1: memref<16x8x32xf32, #tpu.memory_space<vmem>>, %arg2: memref<16x8xi32, #tpu.memory_space<vmem>>, %arg3: memref<1x32xf32, #tpu.memory_space<vmem>>, %arg4: memref<1xf32, #tpu.memory_space<smem>>, %arg5: memref<32x128xf32, #tpu.memory_space<vmem>>, %arg6: memref<1x128xf32, #tpu.memory_space<vmem>>, %arg7: memref<16x128xf32, #tpu.memory_space<vmem>>, %arg8: memref<16x8xf32, #tpu.memory_space<vmem>>) attributes {dimension_semantics = [#tpu.dimension_semantics<parallel>], iteration_bounds = array<i64: 1>, scalar_prefetch = 0 : i64, scratch_operands = 0 : i64, tpu.core_type = #tpu.core_type<tc>, window_params = [{transform_indices = @transform_0, window_bounds = array<i64: 16, 8, 32>}, {transform_indices = @transform_1, window_bounds = array<i64: 16, 8>}, {pipeline_mode = #tpu.pipeline_mode<synchronous>, transform_indices = @transform_2, window_bounds = array<i64: 1, 32>}, {transform_indices = @transform_3, window_bounds = array<i64: 1>}, {pipeline_mode = #tpu.pipeline_mode<synchronous>, transform_indices = @transform_4, window_bounds = array<i64: 32, 128>}, {pipeline_mode = #tpu.pipeline_mode<synchronous>, transform_indices = @transform_5, window_bounds = array<i64: 1, 128>}, {transform_indices = @transform_6, window_bounds = array<i64: 16, 128>}, {transform_indices = @transform_7, window_bounds = array<i64: 16, 8>}]} {
    %c0 = arith.constant 0 : index
    %c0_0 = arith.constant 0 : index
    %c0_1 = arith.constant 0 : index
    %0 = vector.load %arg1[%c0, %c0_0, %c0_1] : memref<16x8x32xf32, #tpu.memory_space<vmem>>, vector<16x8x32xf32>
    %c0_2 = arith.constant 0 : index
    %c0_3 = arith.constant 0 : index
    %1 = vector.load %arg3[%c0_2, %c0_3] : memref<1x32xf32, #tpu.memory_space<vmem>>, vector<1x32xf32>
    %c0_4 = arith.constant 0 : index
    %2 = memref.load %arg4[%c0_4] : memref<1xf32, #tpu.memory_space<smem>>
    %3 = vector.shape_cast %1 : vector<1x32xf32> to vector<1x1x32xf32>
    %4 = vector.broadcast %3 : vector<1x1x32xf32> to vector<16x8x32xf32>
    %5 = arith.mulf %0, %4 : vector<16x8x32xf32>
    %cst = arith.constant dense<0.000000e+00> : vector<16x8xf32>
    %6 = vector.multi_reduction <add>, %5, %cst [2] : vector<16x8x32xf32> to vector<16x8xf32>
    %7 = vector.broadcast %2 : f32 to vector<16x8xf32>
    %8 = arith.addf %6, %7 : vector<16x8xf32>
    %cst_5 = arith.constant 0.176776692 : f32
    %9 = vector.broadcast %cst_5 : f32 to vector<16x8xf32>
    %10 = arith.mulf %8, %9 : vector<16x8xf32>
    %c0_6 = arith.constant 0 : index
    %c0_7 = arith.constant 0 : index
    %11 = vector.load %arg2[%c0_6, %c0_7] : memref<16x8xi32, #tpu.memory_space<vmem>>, vector<16x8xi32>
    %c0_i32 = arith.constant 0 : i32
    %12 = vector.broadcast %c0_i32 : i32 to vector<16x8xi32>
    %13 = arith.cmpi sgt, %11, %12 : vector<16x8xi32>
    %cst_8 = arith.constant 0xFF800000 : f32
    %14 = vector.broadcast %cst_8 : f32 to vector<16x8xf32>
    %15 = arith.select %13, %14, %10 : vector<16x8xi1>, vector<16x8xf32>
    %cst_9 = arith.constant dense<0xFF800000> : vector<16xf32>
    %16 = vector.multi_reduction <maximumf>, %15, %cst_9 [1] : vector<16x8xf32> to vector<16xf32>
    %17 = vector.shape_cast %16 : vector<16xf32> to vector<16x1xf32>
    %18 = vector.broadcast %17 : vector<16x1xf32> to vector<16x8xf32>
    %19 = arith.subf %15, %18 : vector<16x8xf32>
    %20 = math.exp %19 : vector<16x8xf32>
    %cst_10 = arith.constant dense<0.000000e+00> : vector<16xf32>
    %21 = vector.multi_reduction <add>, %20, %cst_10 [1] : vector<16x8xf32> to vector<16xf32>
    %22 = vector.shape_cast %21 : vector<16xf32> to vector<16x1xf32>
    %23 = tpu.reciprocal %22 {approx = true} : vector<16x1xf32> -> vector<16x1xf32>
    %24 = vector.broadcast %23 : vector<16x1xf32> to vector<16x8xf32>
    %25 = arith.mulf %20, %24 : vector<16x8xf32>
    %c0_11 = arith.constant 0 : index
    %c0_12 = arith.constant 0 : index
    %26 = vector.load %arg8[%c0_11, %c0_12] : memref<16x8xf32, #tpu.memory_space<vmem>>, vector<16x8xf32>
    tpu.vector_store %arg8[%c0_11, %c0_12], %25 {strides = array<i32>} : memref<16x8xf32, #tpu.memory_space<vmem>>, vector<16x8xf32>,
    %27 = vector.shape_cast %25 : vector<16x8xf32> to vector<16x8x1xf32>
    %28 = vector.broadcast %27 : vector<16x8x1xf32> to vector<16x8x32xf32>
    %29 = arith.mulf %28, %0 : vector<16x8x32xf32>
    %cst_13 = arith.constant dense<0.000000e+00> : vector<16x32xf32>
    %30 = vector.multi_reduction <add>, %29, %cst_13 [1] : vector<16x8x32xf32> to vector<16x32xf32>
    %c0_14 = arith.constant 0 : index
    %c0_15 = arith.constant 0 : index
    %31 = vector.load %arg5[%c0_14, %c0_15] : memref<32x128xf32, #tpu.memory_space<vmem>>, vector<32x128xf32>
    %cst_16 = arith.constant dense<0.000000e+00> : vector<16x128xf32>
    %32 = tpu.matmul %30, %31, %cst_16 {dimension_numbers = #tpu.dot_dimension_numbers<[1], [0], [0], [1], [0, 0, 1, 1], [], []>} : vector<16x32xf32>, vector<32x128xf32>, vector<16x128xf32> -> vector<16x128xf32>
    %c0_17 = arith.constant 0 : index
    %c0_18 = arith.constant 0 : index
    %33 = vector.load %arg6[%c0_17, %c0_18] : memref<1x128xf32, #tpu.memory_space<vmem>>, vector<1x128xf32>
    %34 = vector.broadcast %33 : vector<1x128xf32> to vector<16x128xf32>
    %35 = arith.addf %32, %34 : vector<16x128xf32>
    %c0_19 = arith.constant 0 : index
    %c0_20 = arith.constant 0 : index
    %36 = vector.load %arg7[%c0_19, %c0_20] : memref<16x128xf32, #tpu.memory_space<vmem>>, vector<16x128xf32>
    tpu.vector_store %arg7[%c0_19, %c0_20], %35 {strides = array<i32>} : memref<16x128xf32, #tpu.memory_space<vmem>>, vector<16x128xf32>,
    return
  }
  func.func @transform_0(%arg0: i32) -> (i32, i32, i32) {
    %c0_i32 = arith.constant 0 : i32
    %c0_i32_0 = arith.constant 0 : i32
    %c0_i32_1 = arith.constant 0 : i32
    return %arg0, %c0_i32, %c0_i32_0 : i32, i32, i32
  }
  func.func @transform_1(%arg0: i32) -> (i32, i32) {
    %c0_i32 = arith.constant 0 : i32
    %c0_i32_0 = arith.constant 0 : i32
    return %arg0, %c0_i32 : i32, i32
  }
  func.func @transform_2(%arg0: i32) -> (i32, i32) {
    %c0_i32 = arith.constant 0 : i32
    %c0_i32_0 = arith.constant 0 : i32
    %c0_i32_1 = arith.constant 0 : i32
    return %c0_i32, %c0_i32_0 : i32, i32
  }
  func.func @transform_3(%arg0: i32) -> i32 {
    %c0_i32 = arith.constant 0 : i32
    %c0_i32_0 = arith.constant 0 : i32
    return %c0_i32 : i32
  }
  func.func @transform_4(%arg0: i32) -> (i32, i32) {
    %c0_i32 = arith.constant 0 : i32
    %c0_i32_0 = arith.constant 0 : i32
    %c0_i32_1 = arith.constant 0 : i32
    return %c0_i32, %c0_i32_0 : i32, i32
  }
  func.func @transform_5(%arg0: i32) -> (i32, i32) {
    %c0_i32 = arith.constant 0 : i32
    %c0_i32_0 = arith.constant 0 : i32
    %c0_i32_1 = arith.constant 0 : i32
    return %c0_i32, %c0_i32_0 : i32, i32
  }
  func.func @transform_6(%arg0: i32) -> (i32, i32) {
    %c0_i32 = arith.constant 0 : i32
    %c0_i32_0 = arith.constant 0 : i32
    return %arg0, %c0_i32 : i32, i32
  }
  func.func @transform_7(%arg0: i32) -> (i32, i32) {
    %c0_i32 = arith.constant 0 : i32
    %c0_i32_0 = arith.constant 0 : i32
    return %arg0, %c0_i32 : i32, i32
  }
}

</mosaic_0001>

<llo_original>
// kernel: tpu_custom_call.1
$region0: #{tpu_custom_call.1}
  #allocation0 [shape = 'u32[]', space=smem, size = 0x4, offset = 0x4, fixed_abs, tag = 'smem constant byte address 0x4 - core index']
  #allocation1 [shape = 'u32[72,128]{1,0:T(1,128)}', space=vmem, size = 0x9000, scoped, tag = 'internal scratch']
  #allocation2 [shape = 'f32[1]{0:T(128)S(6)}', space=smem, size = 0x200, scoped, tag = 'scoped memory for tpu_custom_call.1']
  %s0 = inlined_call_operand.hbm [shape: f32[16,8,32], index: 0, kind: input, shape index: {}]
  %s1 = inlined_call_operand.vmem [shape: s32[16,8], index: 1, kind: input, shape index: {}]
  %s2 = inlined_call_operand.vmem [shape: f32[1,32], index: 2, kind: input, shape index: {}]
  %s3 = inlined_call_operand.<no memory space> [shape: f32[1], index: 3, kind: input, shape index: {}]
  %s4 = inlined_call_operand.hbm [shape: f32[32,128], index: 4, kind: input, shape index: {}]
  %s5 = inlined_call_operand.vmem [shape: f32[1,128], index: 5, kind: input, shape index: {}]
  %s6 = inlined_call_operand.hbm [shape: f32[16,128], index: 6, kind: output, shape index: {0}]
  %s7 = inlined_call_operand.vmem [shape: f32[16,8], index: 7, kind: output, shape index: {1}]
  %8 = xla_tuple %s6, %s7
  %s9 = sld [smem:[#allocation0]]
  $region50: #{tpu_custom_call.1} parent=0
    _
  %s11 = ssub.s32 1, %s9
  %s12 = scalar_select 0, %s11, %s9
  %13 = sst [smem:[#allocation2]] %s3
  $region1: #{tpu_custom_call.1} parent=0
    #allocation3 [shape = 'u8[65536]{0}', space=vmem, size = 0x10000, scoped, tag = 'input window, operand 0, single buffered']
    #allocation4 [shape = 's32[1]{0}', space=sflag, size = 0x4, scoped, tag = 'scoped memory for tpu_custom_call.1']
    #allocation5 [shape = 's32[1]{0}', space=sflag, size = 0x4, scoped, tag = 'scoped memory for tpu_custom_call.1']
    #allocation6 [shape = 'u8[16384]{0}', space=vmem, size = 0x4000, scoped, tag = 'input window, operand 4, single buffered']
    #allocation7 [shape = 's32[1]{0}', space=sflag, size = 0x4, scoped, tag = 'scoped memory for tpu_custom_call.1']
    #allocation8 [shape = 'u8[8192]{0}', space=vmem, size = 0x2000, scoped, tag = 'output window, operand 0, single buffered']
    %14 = vsyncpa [#allocation4], 0
    %15 = vsyncpa [#allocation7], 0
    %16 = vsyncpa [#allocation5], 0
    // Predicated region
    $region2: #{tpu_custom_call.1} parent=1 // pred_check
      _
    $region3: #{tpu_custom_call.1} parent=1 // pred_check_branch
      %18 = sbr.rel (0) target = $region5
    $region4: #{tpu_custom_call.1} parent=1 // pred_region
      %20 = vsyncadd [#allocation4], 0
      %s21 = sshll.u32 %s0, 4
      %s22 = int_to_ptr.hbm [resolvable:$true] %s21
      %s23 = sshll.u32 [#allocation3], 4
      %s24 = int_to_ptr.vmem [resolvable:$true] %s23
      %29 = dma.hbm_to_vmem [thread:$0]  %s22, 2048, %s24, [#allocation4], 128, 128, 8
    $region5: #{tpu_custom_call.1} parent=1 // pred_fallthru
      _
    // Predicated region
    $region6: #{tpu_custom_call.1} parent=1 // pred_check
      _
    $region7: #{tpu_custom_call.1} parent=1 // pred_check_branch
      %31 = sbr.rel (0) target = $region9
    $region8: #{tpu_custom_call.1} parent=1 // pred_region
      _
    $region9: #{tpu_custom_call.1} parent=1 // pred_fallthru
      _
    // Predicated region
    $region10: #{tpu_custom_call.1} parent=1 // pred_check
      _
    $region11: #{tpu_custom_call.1} parent=1 // pred_check_branch
      %33 = sbr.rel (0) target = $region13
    $region12: #{tpu_custom_call.1} parent=1 // pred_region
      _
    $region13: #{tpu_custom_call.1} parent=1 // pred_fallthru
      _
    // Predicated region
    $region14: #{tpu_custom_call.1} parent=1 // pred_check
      _
    $region15: #{tpu_custom_call.1} parent=1 // pred_check_branch
      %35 = sbr.rel (0) target = $region17
    $region16: #{tpu_custom_call.1} parent=1 // pred_region
      _
    $region17: #{tpu_custom_call.1} parent=1 // pred_fallthru
      _
    // Predicated region
    $region18: #{tpu_custom_call.1} parent=1 // pred_check
      _
    $region19: #{tpu_custom_call.1} parent=1 // pred_check_branch
      %37 = sbr.rel (0) target = $region21
    $region20: #{tpu_custom_call.1} parent=1 // pred_region
      %39 = vsyncadd [#allocation7], 0
      %s40 = sshll.u32 %s4, 4
      %s41 = int_to_ptr.hbm [resolvable:$true] %s40
      %s42 = sshll.u32 [#allocation6], 4
      %s43 = int_to_ptr.vmem [resolvable:$true] %s42
      %48 = dma.hbm_to_vmem [thread:$0]  %s41, 512, %s43, [#allocation7], 128, 128, 8
    $region21: #{tpu_custom_call.1} parent=1 // pred_fallthru
      _
    // Predicated region
    $region22: #{tpu_custom_call.1} parent=1 // pred_check
      _
    $region23: #{tpu_custom_call.1} parent=1 // pred_check_branch
      %50 = sbr.rel (0) target = $region25
    $region24: #{tpu_custom_call.1} parent=1 // pred_region
      _
    $region25: #{tpu_custom_call.1} parent=1 // pred_fallthru
      _
    // Predicated region
    $region26: #{tpu_custom_call.1} parent=1 // pred_check
      _
    $region27: #{tpu_custom_call.1} parent=1 // pred_check_branch
      %52 = sbr.rel (0) target = $region29
    $region28: #{tpu_custom_call.1} parent=1 // pred_region
      %54 = dma.done [#allocation4], 2048
    $region29: #{tpu_custom_call.1} parent=1 // pred_fallthru
      _
    // Predicated region
    $region30: #{tpu_custom_call.1} parent=1 // pred_check
      _
    $region31: #{tpu_custom_call.1} parent=1 // pred_check_branch
      %56 = sbr.rel (0) target = $region33
    $region32: #{tpu_custom_call.1} parent=1 // pred_region
      %58 = dma.done [#allocation7], 512
    $region33: #{tpu_custom_call.1} parent=1 // pred_fallthru
      _
    %v59 = vld [vmem:[#allocation3] sm:$0xff]
    %v60 = vld [vmem:[#allocation3 + $0x8] sm:$0xff]
    %v61 = vld [vmem:[#allocation3 + $0x10] sm:$0xff]
    %v62 = vld [vmem:[#allocation3 + $0x18] sm:$0xff]
    %v63 = vld [vmem:[#allocation3 + $0x20] sm:$0xff]
    %v64 = vld [vmem:[#allocation3 + $0x28] sm:$0xff]
    %v65 = vld [vmem:[#allocation3 + $0x30] sm:$0xff]
    %v66 = vld [vmem:[#allocation3 + $0x38] sm:$0xff]
    %v67 = vld [vmem:[#allocation3 + $0x40] sm:$0xff]
    %v68 = vld [vmem:[#allocation3 + $0x48] sm:$0xff]
    %v69 = vld [vmem:[#allocation3 + $0x50] sm:$0xff]
    %v70 = vld [vmem:[#allocation3 + $0x58] sm:$0xff]
    %v71 = vld [vmem:[#allocation3 + $0x60] sm:$0xff]
    %v72 = vld [vmem:[#allocation3 + $0x68] sm:$0xff]
    %v73 = vld [vmem:[#allocation3 + $0x70] sm:$0xff]
    %v74 = vld [vmem:[#allocation3 + $0x78] sm:$0xff]
    %v75 = vld [vmem:[%s2] sm:$0x1]
    %s76 = sld [smem:[#allocation2]]
    %v78 = vperm.slane %v75, 0
    %v80 = vmul.f32 %v59, %v78
    %v81 = vmul.f32 %v60, %v78
    %v82 = vmul.f32 %v61, %v78
    %v83 = vmul.f32 %v62, %v78
    %v84 = vmul.f32 %v63, %v78
    %v85 = vmul.f32 %v64, %v78
    %v86 = vmul.f32 %v65, %v78
    %v87 = vmul.f32 %v66, %v78
    %v88 = vmul.f32 %v67, %v78
    %v89 = vmul.f32 %v68, %v78
    %v90 = vmul.f32 %v69, %v78
    %v91 = vmul.f32 %v70, %v78
    %v92 = vmul.f32 %v71, %v78
    %v93 = vmul.f32 %v72, %v78
    %v94 = vmul.f32 %v73, %v78
    %v95 = vmul.f32 %v74, %v78
    %vm96 = vcmask 261120
    %v97 = vsel %vm96, %v80, 0.0
    %98 = vadd.xlane.f32.xlu0 %v97
    %v99 = vpop.xlane.xlu0 %98
    %v100 = vsel %vm96, %v81, 0.0
    %101 = vadd.xlane.f32.xlu0 %v100
    %v102 = vpop.xlane.xlu0 %101
    %v103 = vsel %vm96, %v82, 0.0
    %104 = vadd.xlane.f32.xlu0 %v103
    %v105 = vpop.xlane.xlu0 %104
    %v106 = vsel %vm96, %v83, 0.0
    %107 = vadd.xlane.f32.xlu0 %v106
    %v108 = vpop.xlane.xlu0 %107
    %v109 = vsel %vm96, %v84, 0.0
    %110 = vadd.xlane.f32.xlu0 %v109
    %v111 = vpop.xlane.xlu0 %110
    %v112 = vsel %vm96, %v85, 0.0
    %113 = vadd.xlane.f32.xlu0 %v112
    %v114 = vpop.xlane.xlu0 %113
    %v115 = vsel %vm96, %v86, 0.0
    %116 = vadd.xlane.f32.xlu0 %v115
    %v117 = vpop.xlane.xlu0 %116
    %v118 = vsel %vm96, %v87, 0.0
    %119 = vadd.xlane.f32.xlu0 %v118
    %v120 = vpop.xlane.xlu0 %119
    %v121 = vsel %vm96, %v88, 0.0
    %122 = vadd.xlane.f32.xlu0 %v121
    %v123 = vpop.xlane.xlu0 %122
    %v124 = vsel %vm96, %v89, 0.0
    %125 = vadd.xlane.f32.xlu0 %v124
    %v126 = vpop.xlane.xlu0 %125
    %v127 = vsel %vm96, %v90, 0.0
    %128 = vadd.xlane.f32.xlu0 %v127
    %v129 = vpop.xlane.xlu0 %128
    %v130 = vsel %vm96, %v91, 0.0
    %131 = vadd.xlane.f32.xlu0 %v130
    %v132 = vpop.xlane.xlu0 %131
    %v133 = vsel %vm96, %v92, 0.0
    %134 = vadd.xlane.f32.xlu0 %v133
    %v135 = vpop.xlane.xlu0 %134
    %v136 = vsel %vm96, %v93, 0.0
    %137 = vadd.xlane.f32.xlu0 %v136
    %v138 = vpop.xlane.xlu0 %137
    %v139 = vsel %vm96, %v94, 0.0
    %140 = vadd.xlane.f32.xlu0 %v139
    %v141 = vpop.xlane.xlu0 %140
    %v142 = vsel %vm96, %v95, 0.0
    %143 = vadd.xlane.f32.xlu0 %v142
    %v144 = vpop.xlane.xlu0 %143
    %v145 = vstv %s76
    %v146 = vadd.f32 %v99, %v145
    %v147 = vadd.f32 %v102, %v145
    %v148 = vadd.f32 %v105, %v145
    %v149 = vadd.f32 %v108, %v145
    %v150 = vadd.f32 %v111, %v145
    %v151 = vadd.f32 %v114, %v145
    %v152 = vadd.f32 %v117, %v145
    %v153 = vadd.f32 %v120, %v145
    %v154 = vadd.f32 %v123, %v145
    %v155 = vadd.f32 %v126, %v145
    %v156 = vadd.f32 %v129, %v145
    %v157 = vadd.f32 %v132, %v145
    %v158 = vadd.f32 %v135, %v145
    %v159 = vadd.f32 %v138, %v145
    %v160 = vadd.f32 %v141, %v145
    %v161 = vadd.f32 %v144, %v145
    %v162 = vmul.f32 %v146, 0.17677669
    %v163 = vmul.f32 %v147, 0.17677669
    %v164 = vmul.f32 %v148, 0.17677669
    %v165 = vmul.f32 %v149, 0.17677669
    %v166 = vmul.f32 %v150, 0.17677669
    %v167 = vmul.f32 %v151, 0.17677669
    %v168 = vmul.f32 %v152, 0.17677669
    %v169 = vmul.f32 %v153, 0.17677669
    %v170 = vmul.f32 %v154, 0.17677669
    %v171 = vmul.f32 %v155, 0.17677669
    %v172 = vmul.f32 %v156, 0.17677669
    %v173 = vmul.f32 %v157, 0.17677669
    %v174 = vmul.f32 %v158, 0.17677669
    %v175 = vmul.f32 %v159, 0.17677669
    %v176 = vmul.f32 %v160, 0.17677669
    %v177 = vmul.f32 %v161, 0.17677669
    %v178 = vld [vmem:[%s1] sm:$0xff]
    %v179 = vld [vmem:[%s1 + $0x8] sm:$0xff]
    %vm180 = vcmp.gt.s32.totalorder %v178, 0
    %vm181 = vcmp.gt.s32.totalorder %v179, 0
    %v198 = vlaneseq
    %v199 = vand.u32 %v198, 127
    %v200 = vperm.slane %v162, %v199
    %v201 = vperm.slane %v163, %v199
    %v202 = vperm.slane %v164, %v199
    %v203 = vperm.slane %v165, %v199
    %v204 = vperm.slane %v166, %v199
    %v205 = vperm.slane %v167, %v199
    %v206 = vperm.slane %v168, %v199
    %v207 = vperm.slane %v169, %v199
    %v208 = vperm.slane %v170, %v199
    %v209 = vperm.slane %v171, %v199
    %v210 = vperm.slane %v172, %v199
    %v211 = vperm.slane %v173, %v199
    %v212 = vperm.slane %v174, %v199
    %v213 = vperm.slane %v175, %v199
    %v214 = vperm.slane %v176, %v199
    %v215 = vperm.slane %v177, %v199
    %vm216 = vcmask 1041409
    %v217 = vsel %vm216, %v201, %v200
    %vm218 = vcmask 1042434
    %v219 = vsel %vm218, %v202, %v217
    %vm220 = vcmask 1043459
    %v221 = vsel %vm220, %v203, %v219
    %vm222 = vcmask 1044484
    %v223 = vsel %vm222, %v204, %v221
    %vm224 = vcmask 1045509
    %v225 = vsel %vm224, %v205, %v223
    %vm226 = vcmask 1046534
    %v227 = vsel %vm226, %v206, %v225
    %vm228 = vcmask 1047559
    %v229 = vsel %vm228, %v207, %v227
    %v230 = vsel %vm216, %v209, %v208
    %v231 = vsel %vm218, %v210, %v230
    %v232 = vsel %vm220, %v211, %v231
    %v233 = vsel %vm222, %v212, %v232
    %v234 = vsel %vm224, %v213, %v233
    %v235 = vsel %vm226, %v214, %v234
    %v236 = vsel %vm228, %v215, %v235
    %v239 = vsel %vm180, -inf, %v229
    %v240 = vsel %vm181, -inf, %v236
    %vm241 = vcmask 64512
    %v242 = vsel %vm241, %v239, -inf
    %243 = vmax.xlane.f32.xlu0 %v242
    %v244 = vpop.xlane.xlu0 %243
    %v245 = vsel %vm241, %v240, -inf
    %246 = vmax.xlane.f32.xlu0 %v245
    %v247 = vpop.xlane.xlu0 %246
    %v248 = vsub.f32 %v239, %v244
    %v249 = vsub.f32 %v240, %v247
    %v250 = vmul.f32 %v248, 1.442695
    %v251 = vpow.pop %v250
    %v252 = vmul.f32 %v249, 1.442695
    %v253 = vpow.pop %v252
    %v254 = vsel %vm241, %v251, 0.0
    %255 = vadd.xlane.f32.xlu0 %v254
    %v256 = vpop.xlane.xlu0 %255
    %v257 = vsel %vm241, %v253, 0.0
    %258 = vadd.xlane.f32.xlu0 %v257
    %v259 = vpop.xlane.xlu0 %258
    %v260 = vrcp.pop %v256
    %v261 = vrcp.pop %v259
    %v262 = vmul.f32 %v251, %v260
    %v263 = vmul.f32 %v253, %v261
    %264 = vst.msk [vmem:[%s7] sm:$0xff] %vm241, %v262
    %265 = vst.msk [vmem:[%s7 + $0x8] sm:$0xff] %vm241, %v263
    %v266 = vperm.slane %v262, 0
    %v267 = vlaneseq
    %v268 = vshrl.u32 %v267, 7
    %270 = vset.pattern.permute.xlu0 %v268
    %271 = vperm.xlu0 %270, %v266
    %v272 = vpop.permute.xlu0 %271
    %v273 = vperm.slane %v262, 1
    %v274 = vlaneseq
    %v275 = vshrl.u32 %v274, 7
    %277 = vset.pattern.permute.xlu0 %v275
    %278 = vperm.xlu0 %277, %v273
    %v279 = vpop.permute.xlu0 %278
    %v280 = vperm.slane %v262, 2
    %v281 = vlaneseq
    %v282 = vshrl.u32 %v281, 7
    %284 = vset.pattern.permute.xlu0 %v282
    %285 = vperm.xlu0 %284, %v280
    %v286 = vpop.permute.xlu0 %285
    %v287 = vperm.slane %v262, 3
    %v288 = vlaneseq
    %v289 = vshrl.u32 %v288, 7
    %291 = vset.pattern.permute.xlu0 %v289
    %292 = vperm.xlu0 %291, %v287
    %v293 = vpop.permute.xlu0 %292
    %v294 = vperm.slane %v262, 4
    %v295 = vlaneseq
    %v296 = vshrl.u32 %v295, 7
    %298 = vset.pattern.permute.xlu0 %v296
    %299 = vperm.xlu0 %298, %v294
    %v300 = vpop.permute.xlu0 %299
    %v301 = vperm.slane %v262, 5
    %v302 = vlaneseq
    %v303 = vshrl.u32 %v302, 7
    %305 = vset.pattern.permute.xlu0 %v303
    %306 = vperm.xlu0 %305, %v301
    %v307 = vpop.permute.xlu0 %306
    %v308 = vperm.slane %v262, 6
    %v309 = vlaneseq
    %v310 = vshrl.u32 %v309, 7
    %312 = vset.pattern.permute.xlu0 %v310
    %313 = vperm.xlu0 %312, %v308
    %v314 = vpop.permute.xlu0 %313
    %v315 = vperm.slane %v262, 7
    %v316 = vlaneseq
    %v317 = vshrl.u32 %v316, 7
    %319 = vset.pattern.permute.xlu0 %v317
    %320 = vperm.xlu0 %319, %v315
    %v321 = vpop.permute.xlu0 %320
    %v322 = vperm.slane %v263, 0
    %v323 = vlaneseq
    %v324 = vshrl.u32 %v323, 7
    %326 = vset.pattern.permute.xlu0 %v324
    %327 = vperm.xlu0 %326, %v322
    %v328 = vpop.permute.xlu0 %327
    %v329 = vperm.slane %v263, 1
    %v330 = vlaneseq
    %v331 = vshrl.u32 %v330, 7
    %333 = vset.pattern.permute.xlu0 %v331
    %334 = vperm.xlu0 %333, %v329
    %v335 = vpop.permute.xlu0 %334
    %v336 = vperm.slane %v263, 2
    %v337 = vlaneseq
    %v338 = vshrl.u32 %v337, 7
    %340 = vset.pattern.permute.xlu0 %v338
    %341 = vperm.xlu0 %340, %v336
    %v342 = vpop.permute.xlu0 %341
    %v343 = vperm.slane %v263, 3
    %v344 = vlaneseq
    %v345 = vshrl.u32 %v344, 7
    %347 = vset.pattern.permute.xlu0 %v345
    %348 = vperm.xlu0 %347, %v343
    %v349 = vpop.permute.xlu0 %348
    %v350 = vperm.slane %v263, 4
    %v351 = vlaneseq
    %v352 = vshrl.u32 %v351, 7
    %354 = vset.pattern.permute.xlu0 %v352
    %355 = vperm.xlu0 %354, %v350
    %v356 = vpop.permute.xlu0 %355
    %v357 = vperm.slane %v263, 5
    %v358 = vlaneseq
    %v359 = vshrl.u32 %v358, 7
    %361 = vset.pattern.permute.xlu0 %v359
    %362 = vperm.xlu0 %361, %v357
    %v363 = vpop.permute.xlu0 %362
    %v364 = vperm.slane %v263, 6
    %v365 = vlaneseq
    %v366 = vshrl.u32 %v365, 7
    %368 = vset.pattern.permute.xlu0 %v366
    %369 = vperm.xlu0 %368, %v364
    %v370 = vpop.permute.xlu0 %369
    %v371 = vperm.slane %v263, 7
    %v372 = vlaneseq
    %v373 = vshrl.u32 %v372, 7
    %375 = vset.pattern.permute.xlu0 %v373
    %376 = vperm.xlu0 %375, %v371
    %v377 = vpop.permute.xlu0 %376
    %v378 = vmul.f32 %v272, %v59
    %v379 = vmul.f32 %v279, %v60
    %v380 = vmul.f32 %v286, %v61
    %v381 = vmul.f32 %v293, %v62
    %v382 = vmul.f32 %v300, %v63
    %v383 = vmul.f32 %v307, %v64
    %v384 = vmul.f32 %v314, %v65
    %v385 = vmul.f32 %v321, %v66
    %v386 = vmul.f32 %v328, %v67
    %v387 = vmul.f32 %v335, %v68
    %v388 = vmul.f32 %v342, %v69
    %v389 = vmul.f32 %v349, %v70
    %v390 = vmul.f32 %v356, %v71
    %v391 = vmul.f32 %v363, %v72
    %v392 = vmul.f32 %v370, %v73
    %v393 = vmul.f32 %v377, %v74
    %v394 = vsel %vm96, %v378, 0.0
    %v395 = vrot.slane %v394, 4
    %v396 = vadd.f32 %v394, %v395
    %v397 = vrot.slane %v396, 2
    %v398 = vadd.f32 %v396, %v397
    %v399 = vrot.slane %v398, 1
    %v400 = vadd.f32 %v398, %v399
    %v401 = vsel %vm96, %v379, 0.0
    %v402 = vrot.slane %v401, 4
    %v403 = vadd.f32 %v401, %v402
    %v404 = vrot.slane %v403, 2
    %v405 = vadd.f32 %v403, %v404
    %v406 = vrot.slane %v405, 1
    %v407 = vadd.f32 %v405, %v406
    %v408 = vsel %vm96, %v380, 0.0
    %v409 = vrot.slane %v408, 4
    %v410 = vadd.f32 %v408, %v409
    %v411 = vrot.slane %v410, 2
    %v412 = vadd.f32 %v410, %v411
    %v413 = vrot.slane %v412, 1
    %v414 = vadd.f32 %v412, %v413
    %v415 = vsel %vm96, %v381, 0.0
    %v416 = vrot.slane %v415, 4
    %v417 = vadd.f32 %v415, %v416
    %v418 = vrot.slane %v417, 2
    %v419 = vadd.f32 %v417, %v418
    %v420 = vrot.slane %v419, 1
    %v421 = vadd.f32 %v419, %v420
    %v422 = vsel %vm96, %v382, 0.0
    %v423 = vrot.slane %v422, 4
    %v424 = vadd.f32 %v422, %v423
    %v425 = vrot.slane %v424, 2
    %v426 = vadd.f32 %v424, %v425
    %v427 = vrot.slane %v426, 1
    %v428 = vadd.f32 %v426, %v427
    %v429 = vsel %vm96, %v383, 0.0
    %v430 = vrot.slane %v429, 4
    %v431 = vadd.f32 %v429, %v430
    %v432 = vrot.slane %v431, 2
    %v433 = vadd.f32 %v431, %v432
    %v434 = vrot.slane %v433, 1
    %v435 = vadd.f32 %v433, %v434
    %v436 = vsel %vm96, %v384, 0.0
    %v437 = vrot.slane %v436, 4
    %v438 = vadd.f32 %v436, %v437
    %v439 = vrot.slane %v438, 2
    %v440 = vadd.f32 %v438, %v439
    %v441 = vrot.slane %v440, 1
    %v442 = vadd.f32 %v440, %v441
    %v443 = vsel %vm96, %v385, 0.0
    %v444 = vrot.slane %v443, 4
    %v445 = vadd.f32 %v443, %v444
    %v446 = vrot.slane %v445, 2
    %v447 = vadd.f32 %v445, %v446
    %v448 = vrot.slane %v447, 1
    %v449 = vadd.f32 %v447, %v448
    %v450 = vsel %vm96, %v386, 0.0
    %v451 = vrot.slane %v450, 4
    %v452 = vadd.f32 %v450, %v451
    %v453 = vrot.slane %v452, 2
    %v454 = vadd.f32 %v452, %v453
    %v455 = vrot.slane %v454, 1
    %v456 = vadd.f32 %v454, %v455
    %v457 = vsel %vm96, %v387, 0.0
    %v458 = vrot.slane %v457, 4
    %v459 = vadd.f32 %v457, %v458
    %v460 = vrot.slane %v459, 2
    %v461 = vadd.f32 %v459, %v460
    %v462 = vrot.slane %v461, 1
    %v463 = vadd.f32 %v461, %v462
    %v464 = vsel %vm96, %v388, 0.0
    %v465 = vrot.slane %v464, 4
    %v466 = vadd.f32 %v464, %v465
    %v467 = vrot.slane %v466, 2
    %v468 = vadd.f32 %v466, %v467
    %v469 = vrot.slane %v468, 1
    %v470 = vadd.f32 %v468, %v469
    %v471 = vsel %vm96, %v389, 0.0
    %v472 = vrot.slane %v471, 4
    %v473 = vadd.f32 %v471, %v472
    %v474 = vrot.slane %v473, 2
    %v475 = vadd.f32 %v473, %v474
    %v476 = vrot.slane %v475, 1
    %v477 = vadd.f32 %v475, %v476
    %v478 = vsel %vm96, %v390, 0.0
    %v479 = vrot.slane %v478, 4
    %v480 = vadd.f32 %v478, %v479
    %v481 = vrot.slane %v480, 2
    %v482 = vadd.f32 %v480, %v481
    %v483 = vrot.slane %v482, 1
    %v484 = vadd.f32 %v482, %v483
    %v485 = vsel %vm96, %v391, 0.0
    %v486 = vrot.slane %v485, 4
    %v487 = vadd.f32 %v485, %v486
    %v488 = vrot.slane %v487, 2
    %v489 = vadd.f32 %v487, %v488
    %v490 = vrot.slane %v489, 1
    %v491 = vadd.f32 %v489, %v490
    %v492 = vsel %vm96, %v392, 0.0
    %v493 = vrot.slane %v492, 4
    %v494 = vadd.f32 %v492, %v493
    %v495 = vrot.slane %v494, 2
    %v496 = vadd.f32 %v494, %v495
    %v497 = vrot.slane %v496, 1
    %v498 = vadd.f32 %v496, %v497
    %v499 = vsel %vm96, %v393, 0.0
    %v500 = vrot.slane %v499, 4
    %v501 = vadd.f32 %v499, %v500
    %v502 = vrot.slane %v501, 2
    %v503 = vadd.f32 %v501, %v502
    %v504 = vrot.slane %v503, 1
    %v505 = vadd.f32 %v503, %v504
    %v506 = vld [vmem:[#allocation6] sm:$0xff]
    %v507 = vld [vmem:[#allocation6 + $0x8] sm:$0xff]
    %v508 = vld [vmem:[#allocation6 + $0x10] sm:$0xff]
    %v509 = vld [vmem:[#allocation6 + $0x18] sm:$0xff]
    %v510 = vld [vmem:[%s5] sm:$0x1]
    %v512 = vperm.slane %v510, 0
    %v530 = vsel %vm216, %v407, %v400
    %v531 = vsel %vm218, %v414, %v530
    %v532 = vsel %vm220, %v421, %v531
    %v533 = vsel %vm222, %v428, %v532
    %v534 = vsel %vm224, %v435, %v533
    %v535 = vsel %vm226, %v442, %v534
    %v536 = vsel %vm228, %v449, %v535
    %v537 = vsel %vm216, %v463, %v456
    %v538 = vsel %vm218, %v470, %v537
    %v539 = vsel %vm220, %v477, %v538
    %v540 = vsel %vm222, %v484, %v539
    %v541 = vsel %vm224, %v491, %v540
    %v542 = vsel %vm226, %v498, %v541
    %v543 = vsel %vm228, %v505, %v542
    %v544 = vsel %vm96, %v536, 0
    %v546 = vsel %vm96, %v543, 0
    %548 = vmatpush.msra.mxu0 0.0
    %549 = vmatpush.msra.mxu0 0.0
    %550 = vmatpush.msra.mxu0 0.0
    %551 = vmatpush.msra.mxu0 0.0
    %552 = vmatpush.msra.mxu0 0.0
    %553 = vmatpush.msra.mxu0 0.0
    %554 = vmatpush.msra.mxu0 0.0
    %555 = vmatpush.msra.mxu0 0.0
    %556 = vmatpush.msra.mxu0 0.0
    %557 = vmatpush.msra.mxu0 0.0
    %558 = vmatpush.msra.mxu0 0.0
    %559 = vmatpush.msra.mxu0 0.0
    %560 = vmatpush.msra.mxu0 %v509
    %561 = vmatpush.msra.mxu0 %v508
    %562 = vmatpush.msra.mxu0 %v507
    %563 = vmatpush.msra.mxu0 %v506
    %564 = vmatmul.f32.gmra.mxu0 %v544
    %v565 = vpop.f32.mrf.mxu0
    %v566 = vadd.f32 %v512, %v565
    %567 = vmatmul.f32.gmra.mxu0 %v546
    %v568 = vpop.f32.mrf.mxu0
    %v569 = vadd.f32 %v512, %v568
    %570 = vdwg.mxu0
    %571 = vst [vmem:[#allocation8] sm:$0xff] %v566
    %572 = vst [vmem:[#allocation8 + $0x8] sm:$0xff] %v569
    // Predicated region
    $region34: #{tpu_custom_call.1} parent=1 // pred_check
      _
    $region35: #{tpu_custom_call.1} parent=1 // pred_check_branch
      %574 = sbr.rel (0) target = $region37
    $region36: #{tpu_custom_call.1} parent=1 // pred_region
      %576 = vsyncadd [#allocation5], 0
      %s577 = sshll.u32 [#allocation8], 4
      %s578 = int_to_ptr.vmem [resolvable:$true] %s577
      %s579 = sshll.u32 %s6, 4
      %s580 = int_to_ptr.hbm [resolvable:$true] %s579
      %585 = dma.vmem_to_hbm [thread:$0]  %s578, 256, %s580, [#allocation5], 128, 128, 8
    $region37: #{tpu_custom_call.1} parent=1 // pred_fallthru
      _
    // Predicated region
    $region38: #{tpu_custom_call.1} parent=1 // pred_check
      _
    $region39: #{tpu_custom_call.1} parent=1 // pred_check_branch
      %587 = sbr.rel (0) target = $region41
    $region40: #{tpu_custom_call.1} parent=1 // pred_region
      _
    $region41: #{tpu_custom_call.1} parent=1 // pred_fallthru
      _
    // Predicated region
    $region42: #{tpu_custom_call.1} parent=1 // pred_check
      _
    $region43: #{tpu_custom_call.1} parent=1 // pred_check_branch
      %589 = sbr.rel (0) target = $region45
    $region44: #{tpu_custom_call.1} parent=1 // pred_region
      %591 = dma.done [#allocation5], 256
    $region45: #{tpu_custom_call.1} parent=1 // pred_fallthru
      _
    // Predicated region
    $region46: #{tpu_custom_call.1} parent=1 // pred_check
      _
    $region47: #{tpu_custom_call.1} parent=1 // pred_check_branch
      %593 = sbr.rel (0) target = $region49
    $region48: #{tpu_custom_call.1} parent=1 // pred_region
      _
    $region49: #{tpu_custom_call.1} parent=1 // pred_fallthru
      _
    %594 = vsyncpa [#allocation4], 1
    %595 = vsyncpa [#allocation7], 1
    %596 = vsyncpa [#allocation5], 1

</llo_original>
